<compile_context>
chip_gen: v7x
topology: tpu7x:2x2x1
jax: 0.10.0
libtpu: 0.0.40
codegen_flags: <defaults>
</compile_context>

<pallas_src>
import jax
import jax.numpy as jnp
from jax.experimental import pallas as pl
from jax.experimental.pallas import tpu as pltpu


MAX_PIX = 8192  # pixels per tile (multiple of 128); ~0.7 MiB double-buffered


def _round_up(x, m):
    return ((x + m - 1) // m) * m


# ---------------------------------------------------------------------------
# Pallas kernel: one fused 3->8 per-pixel affine.
#   channels on sublanes, pixels on lanes; explicit VPU FMAs (no MXU).
#   Per-channel stores interleave with the FMA chain (friendly to v5e's
#   single vector-store slot).
# ---------------------------------------------------------------------------
def _fused_affine_kernel(w_ref, b_ref, x_ref, o_ref):
    # w_ref: (8, 3) f32 in SMEM, b_ref: (8,) f32 in SMEM
    # x_ref: (3, PIX) f32 in VMEM, o_ref: (8, PIX) f32 in VMEM
    x0 = x_ref[0:1, :]
    x1 = x_ref[1:2, :]
    x2 = x_ref[2:3, :]
    for c in range(8):
        o_ref[c:c + 1, :] = (w_ref[c, 0] * x0
                             + w_ref[c, 1] * x1
                             + w_ref[c, 2] * x2
                             + b_ref[c])


def fused_conv_bn_chain(w_total, b_total, x):
    """x: (N, 3, H, W) f32 -> (N, 8, H, W) f32 in a single Pallas pass."""
    n, c_in, h, w = x.shape
    assert c_in == 3
    m = h * w
    pix = min(MAX_PIX, _round_up(m, 128))
    m_pad = _round_up(m, pix)

    x_flat = x.reshape(n, c_in, m)            # pure reshape: no transpose glue
    if m_pad != m:
        x_flat = jnp.pad(x_flat, ((0, 0), (0, 0), (0, m_pad - m)))

    grid = (n, m_pad // pix)

    out = pl.pallas_call(
        _fused_affine_kernel,
        out_shape=jax.ShapeDtypeStruct((n, 8, m_pad), jnp.float32),
        grid=grid,
        in_specs=[
            pl.BlockSpec(memory_space=pltpu.MemorySpace.SMEM),   # W_total (8,3)
            pl.BlockSpec(memory_space=pltpu.MemorySpace.SMEM),   # b_total (8,)
            pl.BlockSpec((None, 3, pix), lambda b, p: (b, 0, p)),
        ],
        out_specs=pl.BlockSpec((None, 8, pix), lambda b, p: (b, 0, p)),
        compiler_params=pltpu.CompilerParams(
            dimension_semantics=("parallel", "parallel")),
    )(w_total, b_total, x_flat)

    return out[:, :, :m].reshape(n, 8, h, w)


# ---------------------------------------------------------------------------
# Parameter construction + trace-time folding of the whole affine chain.
# ---------------------------------------------------------------------------
def init_params(key):
    ks = jax.random.split(key, 8)

    def conv_init(k, c_out, c_in):
        bound = 1.0 / (c_in ** 0.5)
        kw, kb = jax.random.split(k)
        w = jax.random.uniform(kw, (c_out, c_in), jnp.float32, -bound, bound)
        b = jax.random.uniform(kb, (c_out,), jnp.float32, -bound, bound)
        return w, b

    def bn_init(k, c):
        kg, kb, km, kv = jax.random.split(k, 4)
        gamma = 1.0 + 0.1 * jax.random.normal(kg, (c,), jnp.float32)
        beta = 0.1 * jax.random.normal(kb, (c,), jnp.float32)
        mean = 0.1 * jax.random.normal(km, (c,), jnp.float32)
        var = jax.random.uniform(kv, (c,), jnp.float32, 0.5, 1.5)
        return gamma, beta, mean, var

    return {
        "bn1": conv_init(ks[0], 3, 3),
        "bn2": bn_init(ks[1], 8),     # BatchNorm2d(8); only first 3 ch usable
        "bn3": conv_init(ks[2], 8, 3),
        "bn4": conv_init(ks[3], 8, 8),
        "bn5": bn_init(ks[4], 8),
        "bn6": conv_init(ks[5], 8, 8),
        "bn7": conv_init(ks[6], 8, 8),
        "bn8": conv_init(ks[7], 8, 8),
    }


def _bn_affine(gamma, beta, mean, var, c, eps=1e-5):
    scale = gamma[:c] / jnp.sqrt(var[:c] + eps)
    return jnp.diag(scale), beta[:c] - mean[:c] * scale


def _compose(a2, b2, a1, b1):
    # y = A2 (A1 x + b1) + b2  -- explicit f32 sums (avoid low-precision dot)
    a = jnp.sum(a2[:, :, None] * a1[None, :, :], axis=1)
    b = jnp.sum(a2 * b1[None, :], axis=1) + b2
    return a, b


def fold_chain(params):
    """Fold the whole conv/BN chain into a single (8,3) weight, (8,) bias."""
    a, b = params["bn1"]                                       # conv 3->3
    a, b = _compose(*_bn_affine(*params["bn2"], c=3), a, b)    # BN (repaired)
    a, b = _compose(*params["bn3"], a, b)                      # conv 3->8
    a, b = _compose(*params["bn4"], a, b)                      # conv 8->8
    a, b = _compose(*_bn_affine(*params["bn5"], c=8), a, b)    # BN(8)
    a, b = _compose(*params["bn6"], a, b)                      # conv 8->8
    a, b = _compose(*params["bn7"], a, b)                      # conv 8->8
    a, b = _compose(*params["bn8"], a, b)                      # conv 8->8
    return a, b


# ---------------------------------------------------------------------------
# Pure-JAX staged reference (eval-mode BN), for correctness checking.
# ---------------------------------------------------------------------------
def reference_forward(params, x):
    def conv(p, t):
        w, b = p
        y = jnp.sum(w[None, :, :, None, None] * t[:, None, :, :, :], axis=2)
        return y + b[None, :, None, None]

    def bn(p, t, c, eps=1e-5):
        gamma, beta, mean, var = p
        scale = gamma[:c] / jnp.sqrt(var[:c] + eps)
        shift = beta[:c] - mean[:c] * scale
        return t * scale[None, :, None, None] + shift[None, :, None, None]

    v = conv(params["bn1"], x)
    v = bn(params["bn2"], v, 3)
    v = conv(params["bn3"], v)
    v = conv(params["bn4"], v)
    v = bn(params["bn5"], v, 8)
    v = conv(params["bn6"], v)
    v = conv(params["bn7"], v)
    v = conv(params["bn8"], v)
    return v


if __name__ == "__main__":
    key = jax.random.PRNGKey(0)
    k_x, k_p = jax.random.split(key)

    N, C, H, W = 2, 3, 16, 16
    x = jax.random.normal(k_x, (N, C, H, W), jnp.float32)

    params = init_params(k_p)
    w_total, b_total = fold_chain(params)

    out = fused_conv_bn_chain(w_total, b_total, x)
    out = jax.block_until_ready(out)
    assert out.shape == (N, 8, H, W), out.shape

    ref = reference_forward(params, x)
    assert jnp.allclose(out, ref, rtol=1e-3, atol=1e-3), (
        float(jnp.max(jnp.abs(out - ref))))

    print("KERNEL_OK")
</pallas_src>

<mosaic_0001>
module attributes {stable_mosaic.version = 11 : i64} {
  func.func @_fused_affine_kernel(%arg0: i32, %arg1: i32, %arg2: memref<8x3xf32, #tpu.memory_space<smem>>, %arg3: memref<8xf32, #tpu.memory_space<smem>>, %arg4: memref<1x3x256xf32, #tpu.memory_space<vmem>>, %arg5: memref<1x8x256xf32, #tpu.memory_space<vmem>>) attributes {dimension_semantics = [#tpu.dimension_semantics<parallel>, #tpu.dimension_semantics<parallel>], iteration_bounds = array<i64: 2, 1>, scalar_prefetch = 0 : i64, scratch_operands = 0 : i64, tpu.core_type = #tpu.core_type<tc>, window_params = [{transform_indices = @transform_0, window_bounds = array<i64: 8, 3>}, {transform_indices = @transform_1, window_bounds = array<i64: 8>}, {transform_indices = @transform_2, window_bounds = array<i64: 1, 3, 256>}, {transform_indices = @transform_3, window_bounds = array<i64: 1, 8, 256>}]} {
    %c0 = arith.constant 0 : index
    %c0_0 = arith.constant 0 : index
    %c0_1 = arith.constant 0 : index
    %0 = vector.load %arg4[%c0, %c0_0, %c0_1] : memref<1x3x256xf32, #tpu.memory_space<vmem>>, vector<1x1x256xf32>
    %1 = vector.shape_cast %0 : vector<1x1x256xf32> to vector<1x256xf32>
    %c0_2 = arith.constant 0 : index
    %c1 = arith.constant 1 : index
    %c0_3 = arith.constant 0 : index
    %2 = vector.load %arg4[%c0_2, %c1, %c0_3] : memref<1x3x256xf32, #tpu.memory_space<vmem>>, vector<1x1x256xf32>
    %3 = vector.shape_cast %2 : vector<1x1x256xf32> to vector<1x256xf32>
    %c0_4 = arith.constant 0 : index
    %c2 = arith.constant 2 : index
    %c0_5 = arith.constant 0 : index
    %4 = vector.load %arg4[%c0_4, %c2, %c0_5] : memref<1x3x256xf32, #tpu.memory_space<vmem>>, vector<1x1x256xf32>
    %5 = vector.shape_cast %4 : vector<1x1x256xf32> to vector<1x256xf32>
    %c0_6 = arith.constant 0 : index
    %c0_7 = arith.constant 0 : index
    %6 = memref.load %arg2[%c0_6, %c0_7] : memref<8x3xf32, #tpu.memory_space<smem>>
    %7 = vector.broadcast %6 : f32 to vector<1x256xf32>
    %8 = arith.mulf %7, %1 : vector<1x256xf32>
    %c0_8 = arith.constant 0 : index
    %c1_9 = arith.constant 1 : index
    %9 = memref.load %arg2[%c0_8, %c1_9] : memref<8x3xf32, #tpu.memory_space<smem>>
    %10 = vector.broadcast %9 : f32 to vector<1x256xf32>
    %11 = arith.mulf %10, %3 : vector<1x256xf32>
    %12 = arith.addf %8, %11 : vector<1x256xf32>
    %c0_10 = arith.constant 0 : index
    %c2_11 = arith.constant 2 : index
    %13 = memref.load %arg2[%c0_10, %c2_11] : memref<8x3xf32, #tpu.memory_space<smem>>
    %14 = vector.broadcast %13 : f32 to vector<1x256xf32>
    %15 = arith.mulf %14, %5 : vector<1x256xf32>
    %16 = arith.addf %12, %15 : vector<1x256xf32>
    %c0_12 = arith.constant 0 : index
    %17 = memref.load %arg3[%c0_12] : memref<8xf32, #tpu.memory_space<smem>>
    %18 = vector.broadcast %17 : f32 to vector<1x256xf32>
    %19 = arith.addf %16, %18 : vector<1x256xf32>
    %c0_13 = arith.constant 0 : index
    %c0_14 = arith.constant 0 : index
    %c0_15 = arith.constant 0 : index
    %20 = vector.load %arg5[%c0_13, %c0_14, %c0_15] : memref<1x8x256xf32, #tpu.memory_space<vmem>>, vector<1x1x256xf32>
    %21 = vector.shape_cast %20 : vector<1x1x256xf32> to vector<1x256xf32>
    %22 = vector.shape_cast %19 : vector<1x256xf32> to vector<1x1x256xf32>
    tpu.vector_store %arg5[%c0_13, %c0_14, %c0_15], %22 {strides = array<i32>} : memref<1x8x256xf32, #tpu.memory_space<vmem>>, vector<1x1x256xf32>,
    %c1_16 = arith.constant 1 : index
    %c0_17 = arith.constant 0 : index
    %23 = memref.load %arg2[%c1_16, %c0_17] : memref<8x3xf32, #tpu.memory_space<smem>>
    %24 = vector.broadcast %23 : f32 to vector<1x256xf32>
    %25 = arith.mulf %24, %1 : vector<1x256xf32>
    %c1_18 = arith.constant 1 : index
    %c1_19 = arith.constant 1 : index
    %26 = memref.load %arg2[%c1_18, %c1_19] : memref<8x3xf32, #tpu.memory_space<smem>>
    %27 = vector.broadcast %26 : f32 to vector<1x256xf32>
    %28 = arith.mulf %27, %3 : vector<1x256xf32>
    %29 = arith.addf %25, %28 : vector<1x256xf32>
    %c1_20 = arith.constant 1 : index
    %c2_21 = arith.constant 2 : index
    %30 = memref.load %arg2[%c1_20, %c2_21] : memref<8x3xf32, #tpu.memory_space<smem>>
    %31 = vector.broadcast %30 : f32 to vector<1x256xf32>
    %32 = arith.mulf %31, %5 : vector<1x256xf32>
    %33 = arith.addf %29, %32 : vector<1x256xf32>
    %c1_22 = arith.constant 1 : index
    %34 = memref.load %arg3[%c1_22] : memref<8xf32, #tpu.memory_space<smem>>
    %35 = vector.broadcast %34 : f32 to vector<1x256xf32>
    %36 = arith.addf %33, %35 : vector<1x256xf32>
    %c0_23 = arith.constant 0 : index
    %c1_24 = arith.constant 1 : index
    %c0_25 = arith.constant 0 : index
    %37 = vector.load %arg5[%c0_23, %c1_24, %c0_25] : memref<1x8x256xf32, #tpu.memory_space<vmem>>, vector<1x1x256xf32>
    %38 = vector.shape_cast %37 : vector<1x1x256xf32> to vector<1x256xf32>
    %39 = vector.shape_cast %36 : vector<1x256xf32> to vector<1x1x256xf32>
    tpu.vector_store %arg5[%c0_23, %c1_24, %c0_25], %39 {strides = array<i32>} : memref<1x8x256xf32, #tpu.memory_space<vmem>>, vector<1x1x256xf32>,
    %c2_26 = arith.constant 2 : index
    %c0_27 = arith.constant 0 : index
    %40 = memref.load %arg2[%c2_26, %c0_27] : memref<8x3xf32, #tpu.memory_space<smem>>
    %41 = vector.broadcast %40 : f32 to vector<1x256xf32>
    %42 = arith.mulf %41, %1 : vector<1x256xf32>
    %c2_28 = arith.constant 2 : index
    %c1_29 = arith.constant 1 : index
    %43 = memref.load %arg2[%c2_28, %c1_29] : memref<8x3xf32, #tpu.memory_space<smem>>
    %44 = vector.broadcast %43 : f32 to vector<1x256xf32>
    %45 = arith.mulf %44, %3 : vector<1x256xf32>
    %46 = arith.addf %42, %45 : vector<1x256xf32>
    %c2_30 = arith.constant 2 : index
    %c2_31 = arith.constant 2 : index
    %47 = memref.load %arg2[%c2_30, %c2_31] : memref<8x3xf32, #tpu.memory_space<smem>>
    %48 = vector.broadcast %47 : f32 to vector<1x256xf32>
    %49 = arith.mulf %48, %5 : vector<1x256xf32>
    %50 = arith.addf %46, %49 : vector<1x256xf32>
    %c2_32 = arith.constant 2 : index
    %51 = memref.load %arg3[%c2_32] : memref<8xf32, #tpu.memory_space<smem>>
    %52 = vector.broadcast %51 : f32 to vector<1x256xf32>
    %53 = arith.addf %50, %52 : vector<1x256xf32>
    %c0_33 = arith.constant 0 : index
    %c2_34 = arith.constant 2 : index
    %c0_35 = arith.constant 0 : index
    %54 = vector.load %arg5[%c0_33, %c2_34, %c0_35] : memref<1x8x256xf32, #tpu.memory_space<vmem>>, vector<1x1x256xf32>
    %55 = vector.shape_cast %54 : vector<1x1x256xf32> to vector<1x256xf32>
    %56 = vector.shape_cast %53 : vector<1x256xf32> to vector<1x1x256xf32>
    tpu.vector_store %arg5[%c0_33, %c2_34, %c0_35], %56 {strides = array<i32>} : memref<1x8x256xf32, #tpu.memory_space<vmem>>, vector<1x1x256xf32>,
    %c3 = arith.constant 3 : index
    %c0_36 = arith.constant 0 : index
    %57 = memref.load %arg2[%c3, %c0_36] : memref<8x3xf32, #tpu.memory_space<smem>>
    %58 = vector.broadcast %57 : f32 to vector<1x256xf32>
    %59 = arith.mulf %58, %1 : vector<1x256xf32>
    %c3_37 = arith.constant 3 : index
    %c1_38 = arith.constant 1 : index
    %60 = memref.load %arg2[%c3_37, %c1_38] : memref<8x3xf32, #tpu.memory_space<smem>>
    %61 = vector.broadcast %60 : f32 to vector<1x256xf32>
    %62 = arith.mulf %61, %3 : vector<1x256xf32>
    %63 = arith.addf %59, %62 : vector<1x256xf32>
    %c3_39 = arith.constant 3 : index
    %c2_40 = arith.constant 2 : index
    %64 = memref.load %arg2[%c3_39, %c2_40] : memref<8x3xf32, #tpu.memory_space<smem>>
    %65 = vector.broadcast %64 : f32 to vector<1x256xf32>
    %66 = arith.mulf %65, %5 : vector<1x256xf32>
    %67 = arith.addf %63, %66 : vector<1x256xf32>
    %c3_41 = arith.constant 3 : index
    %68 = memref.load %arg3[%c3_41] : memref<8xf32, #tpu.memory_space<smem>>
    %69 = vector.broadcast %68 : f32 to vector<1x256xf32>
    %70 = arith.addf %67, %69 : vector<1x256xf32>
    %c0_42 = arith.constant 0 : index
    %c3_43 = arith.constant 3 : index
    %c0_44 = arith.constant 0 : index
    %71 = vector.load %arg5[%c0_42, %c3_43, %c0_44] : memref<1x8x256xf32, #tpu.memory_space<vmem>>, vector<1x1x256xf32>
    %72 = vector.shape_cast %71 : vector<1x1x256xf32> to vector<1x256xf32>
    %73 = vector.shape_cast %70 : vector<1x256xf32> to vector<1x1x256xf32>
    tpu.vector_store %arg5[%c0_42, %c3_43, %c0_44], %73 {strides = array<i32>} : memref<1x8x256xf32, #tpu.memory_space<vmem>>, vector<1x1x256xf32>,
    %c4 = arith.constant 4 : index
    %c0_45 = arith.constant 0 : index
    %74 = memref.load %arg2[%c4, %c0_45] : memref<8x3xf32, #tpu.memory_space<smem>>
    %75 = vector.broadcast %74 : f32 to vector<1x256xf32>
    %76 = arith.mulf %75, %1 : vector<1x256xf32>
    %c4_46 = arith.constant 4 : index
    %c1_47 = arith.constant 1 : index
    %77 = memref.load %arg2[%c4_46, %c1_47] : memref<8x3xf32, #tpu.memory_space<smem>>
    %78 = vector.broadcast %77 : f32 to vector<1x256xf32>
    %79 = arith.mulf %78, %3 : vector<1x256xf32>
    %80 = arith.addf %76, %79 : vector<1x256xf32>
    %c4_48 = arith.constant 4 : index
    %c2_49 = arith.constant 2 : index
    %81 = memref.load %arg2[%c4_48, %c2_49] : memref<8x3xf32, #tpu.memory_space<smem>>
    %82 = vector.broadcast %81 : f32 to vector<1x256xf32>
    %83 = arith.mulf %82, %5 : vector<1x256xf32>
    %84 = arith.addf %80, %83 : vector<1x256xf32>
    %c4_50 = arith.constant 4 : index
    %85 = memref.load %arg3[%c4_50] : memref<8xf32, #tpu.memory_space<smem>>
    %86 = vector.broadcast %85 : f32 to vector<1x256xf32>
    %87 = arith.addf %84, %86 : vector<1x256xf32>
    %c0_51 = arith.constant 0 : index
    %c4_52 = arith.constant 4 : index
    %c0_53 = arith.constant 0 : index
    %88 = vector.load %arg5[%c0_51, %c4_52, %c0_53] : memref<1x8x256xf32, #tpu.memory_space<vmem>>, vector<1x1x256xf32>
    %89 = vector.shape_cast %88 : vector<1x1x256xf32> to vector<1x256xf32>
    %90 = vector.shape_cast %87 : vector<1x256xf32> to vector<1x1x256xf32>
    tpu.vector_store %arg5[%c0_51, %c4_52, %c0_53], %90 {strides = array<i32>} : memref<1x8x256xf32, #tpu.memory_space<vmem>>, vector<1x1x256xf32>,
    %c5 = arith.constant 5 : index
    %c0_54 = arith.constant 0 : index
    %91 = memref.load %arg2[%c5, %c0_54] : memref<8x3xf32, #tpu.memory_space<smem>>
    %92 = vector.broadcast %91 : f32 to vector<1x256xf32>
    %93 = arith.mulf %92, %1 : vector<1x256xf32>
    %c5_55 = arith.constant 5 : index
    %c1_56 = arith.constant 1 : index
    %94 = memref.load %arg2[%c5_55, %c1_56] : memref<8x3xf32, #tpu.memory_space<smem>>
    %95 = vector.broadcast %94 : f32 to vector<1x256xf32>
    %96 = arith.mulf %95, %3 : vector<1x256xf32>
    %97 = arith.addf %93, %96 : vector<1x256xf32>
    %c5_57 = arith.constant 5 : index
    %c2_58 = arith.constant 2 : index
    %98 = memref.load %arg2[%c5_57, %c2_58] : memref<8x3xf32, #tpu.memory_space<smem>>
    %99 = vector.broadcast %98 : f32 to vector<1x256xf32>
    %100 = arith.mulf %99, %5 : vector<1x256xf32>
    %101 = arith.addf %97, %100 : vector<1x256xf32>
    %c5_59 = arith.constant 5 : index
    %102 = memref.load %arg3[%c5_59] : memref<8xf32, #tpu.memory_space<smem>>
    %103 = vector.broadcast %102 : f32 to vector<1x256xf32>
    %104 = arith.addf %101, %103 : vector<1x256xf32>
    %c0_60 = arith.constant 0 : index
    %c5_61 = arith.constant 5 : index
    %c0_62 = arith.constant 0 : index
    %105 = vector.load %arg5[%c0_60, %c5_61, %c0_62] : memref<1x8x256xf32, #tpu.memory_space<vmem>>, vector<1x1x256xf32>
    %106 = vector.shape_cast %105 : vector<1x1x256xf32> to vector<1x256xf32>
    %107 = vector.shape_cast %104 : vector<1x256xf32> to vector<1x1x256xf32>
    tpu.vector_store %arg5[%c0_60, %c5_61, %c0_62], %107 {strides = array<i32>} : memref<1x8x256xf32, #tpu.memory_space<vmem>>, vector<1x1x256xf32>,
    %c6 = arith.constant 6 : index
    %c0_63 = arith.constant 0 : index
    %108 = memref.load %arg2[%c6, %c0_63] : memref<8x3xf32, #tpu.memory_space<smem>>
    %109 = vector.broadcast %108 : f32 to vector<1x256xf32>
    %110 = arith.mulf %109, %1 : vector<1x256xf32>
    %c6_64 = arith.constant 6 : index
    %c1_65 = arith.constant 1 : index
    %111 = memref.load %arg2[%c6_64, %c1_65] : memref<8x3xf32, #tpu.memory_space<smem>>
    %112 = vector.broadcast %111 : f32 to vector<1x256xf32>
    %113 = arith.mulf %112, %3 : vector<1x256xf32>
    %114 = arith.addf %110, %113 : vector<1x256xf32>
    %c6_66 = arith.constant 6 : index
    %c2_67 = arith.constant 2 : index
    %115 = memref.load %arg2[%c6_66, %c2_67] : memref<8x3xf32, #tpu.memory_space<smem>>
    %116 = vector.broadcast %115 : f32 to vector<1x256xf32>
    %117 = arith.mulf %116, %5 : vector<1x256xf32>
    %118 = arith.addf %114, %117 : vector<1x256xf32>
    %c6_68 = arith.constant 6 : index
    %119 = memref.load %arg3[%c6_68] : memref<8xf32, #tpu.memory_space<smem>>
    %120 = vector.broadcast %119 : f32 to vector<1x256xf32>
    %121 = arith.addf %118, %120 : vector<1x256xf32>
    %c0_69 = arith.constant 0 : index
    %c6_70 = arith.constant 6 : index
    %c0_71 = arith.constant 0 : index
    %122 = vector.load %arg5[%c0_69, %c6_70, %c0_71] : memref<1x8x256xf32, #tpu.memory_space<vmem>>, vector<1x1x256xf32>
    %123 = vector.shape_cast %122 : vector<1x1x256xf32> to vector<1x256xf32>
    %124 = vector.shape_cast %121 : vector<1x256xf32> to vector<1x1x256xf32>
    tpu.vector_store %arg5[%c0_69, %c6_70, %c0_71], %124 {strides = array<i32>} : memref<1x8x256xf32, #tpu.memory_space<vmem>>, vector<1x1x256xf32>,
    %c7 = arith.constant 7 : index
    %c0_72 = arith.constant 0 : index
    %125 = memref.load %arg2[%c7, %c0_72] : memref<8x3xf32, #tpu.memory_space<smem>>
    %126 = vector.broadcast %125 : f32 to vector<1x256xf32>
    %127 = arith.mulf %126, %1 : vector<1x256xf32>
    %c7_73 = arith.constant 7 : index
    %c1_74 = arith.constant 1 : index
    %128 = memref.load %arg2[%c7_73, %c1_74] : memref<8x3xf32, #tpu.memory_space<smem>>
    %129 = vector.broadcast %128 : f32 to vector<1x256xf32>
    %130 = arith.mulf %129, %3 : vector<1x256xf32>
    %131 = arith.addf %127, %130 : vector<1x256xf32>
    %c7_75 = arith.constant 7 : index
    %c2_76 = arith.constant 2 : index
    %132 = memref.load %arg2[%c7_75, %c2_76] : memref<8x3xf32, #tpu.memory_space<smem>>
    %133 = vector.broadcast %132 : f32 to vector<1x256xf32>
    %134 = arith.mulf %133, %5 : vector<1x256xf32>
    %135 = arith.addf %131, %134 : vector<1x256xf32>
    %c7_77 = arith.constant 7 : index
    %136 = memref.load %arg3[%c7_77] : memref<8xf32, #tpu.memory_space<smem>>
    %137 = vector.broadcast %136 : f32 to vector<1x256xf32>
    %138 = arith.addf %135, %137 : vector<1x256xf32>
    %c0_78 = arith.constant 0 : index
    %c7_79 = arith.constant 7 : index
    %c0_80 = arith.constant 0 : index
    %139 = vector.load %arg5[%c0_78, %c7_79, %c0_80] : memref<1x8x256xf32, #tpu.memory_space<vmem>>, vector<1x1x256xf32>
    %140 = vector.shape_cast %139 : vector<1x1x256xf32> to vector<1x256xf32>
    %141 = vector.shape_cast %138 : vector<1x256xf32> to vector<1x1x256xf32>
    tpu.vector_store %arg5[%c0_78, %c7_79, %c0_80], %141 {strides = array<i32>} : memref<1x8x256xf32, #tpu.memory_space<vmem>>, vector<1x1x256xf32>,
    return
  }
  func.func @transform_0(%arg0: i32, %arg1: i32) -> (i32, i32) {
    %c0_i32 = arith.constant 0 : i32
    %c0_i32_0 = arith.constant 0 : i32
    %c0_i32_1 = arith.constant 0 : i32
    return %c0_i32, %c0_i32_0 : i32, i32
  }
  func.func @transform_1(%arg0: i32, %arg1: i32) -> i32 {
    %c0_i32 = arith.constant 0 : i32
    %c0_i32_0 = arith.constant 0 : i32
    return %c0_i32 : i32
  }
  func.func @transform_2(%arg0: i32, %arg1: i32) -> (i32, i32, i32) {
    %c0_i32 = arith.constant 0 : i32
    %c0_i32_0 = arith.constant 0 : i32
    return %arg0, %c0_i32, %arg1 : i32, i32, i32
  }
  func.func @transform_3(%arg0: i32, %arg1: i32) -> (i32, i32, i32) {
    %c0_i32 = arith.constant 0 : i32
    %c0_i32_0 = arith.constant 0 : i32
    return %arg0, %c0_i32, %arg1 : i32, i32, i32
  }
}

</mosaic_0001>

<llo_original>
// kernel: tpu_custom_call.1
$region0: #{tpu_custom_call.1}
  #allocation0 [shape = 'u32[]', space=smem, size = 0x4, offset = 0x4, fixed_abs, tag = 'smem constant byte address 0x4 - core index']
  #allocation1 [shape = 'u32[144,128]{1,0:T(1,128)}', space=vmem, size = 0x12000, scoped, tag = 'internal scratch']
  %s0 = inlined_call_operand.vmem [shape: f32[8,3], index: 0, kind: input, shape index: {}]
  %s1 = inlined_call_operand.vmem [shape: f32[8], index: 1, kind: input, shape index: {}]
  %s2 = inlined_call_operand.vmem [shape: f32[2,3,256], index: 2, kind: input, shape index: {}]
  %s3 = inlined_call_operand.hbm [shape: f32[2,8,256], index: 3, kind: output, shape index: {}]
  %s4 = sld [smem:[#allocation0]]
  $region53: #{tpu_custom_call.1} parent=0
    _
  %s6 = ssub.s32 1, %s4
  %s7 = scalar_select 0, %s6, %s4
  $region1: #{tpu_custom_call.1} parent=0
    #allocation2 [shape = 'u8[4096]{0}', space=smem, size = 0x1000, scoped, tag = 'input window, operand 0, single buffered']
    #allocation3 [shape = 's32[2]{0}', space=sflag, size = 0x8, scoped, tag = 'scoped memory for tpu_custom_call.1']
    #allocation4 [shape = 's32[2]{0}', space=sflag, size = 0x8, scoped, tag = 'scoped memory for tpu_custom_call.1']
    #allocation5 [shape = 'u8[512]{0}', space=smem, size = 0x200, scoped, tag = 'input window, operand 1, single buffered']
    #allocation6 [shape = 's32[1]{0}', space=sflag, size = 0x4, scoped, tag = 'scoped memory for tpu_custom_call.1']
    #allocation7 [shape = 'u8[16384]{0}', space=vmem, size = 0x4000, scoped, tag = 'output window, operand 0']
    %8 = vsyncpa [#allocation4], 0
    %9 = vsyncpa [#allocation6], 0
    %10 = vsyncpa [#allocation3], 0
    %s11 = scalar_lea.sflag [#allocation3], 1
    %12 = vsyncpa %s11, 0
    loop: start=0, step=1, limit=4
    $region2: #{tpu_custom_call.1} parent=1 // loop_pre_header
      _
    $region3: #{tpu_custom_call.1} parent=1 // loop_header
      %s14 = sphi 0, %s18
      %p15 = scmp.ge.s32.totalorder %s14, 4
      %s21 = sphi 0, %s33
      %s22 = sphi 0, %s29
      %s23 = sphi 0, %s21
      %s24 = sphi 0, %s22
      %s25 = sphi 0, %s23
      %s26 = sphi 0, %s24
      %s34 = sphi 0, %s34
      %s36 = sphi 0, %s34
      %s37 = sphi 0, %s36
      %s51 = sphi 0, %s37
      %s55 = sphi 0, %s55
      %s57 = sphi 0, %s55
      %s58 = sphi 0, %s57
      %s72 = sphi 0, %s58
      %s80 = sphi 0, %s82
      %s83 = sphi 0, %s80
      %s84 = sphi 0, %s83
      %s100 = sphi 0, %s84
      %s108 = sphi 0, %s110
      %s111 = sphi 0, %s108
      %s112 = sphi 0, %s111
      %s128 = sphi 0, %s112
    $region4: #{tpu_custom_call.1} parent=1 // loop_header_branch
      %17 = sbr.rel (%p15) target = $region8
    $region5: #{tpu_custom_call.1} parent=1 // loop_body
      %s19 = ssub.s32 %s14, 1
      %s20 = ssub.s32 %s14, 2
      %s27 = sadd.s32 1, %s22
      %p28 = scmp.ge.s32.totalorder %s27, 1
      %s29 = scalar_select %p28, 0, %s27
      %s30 = sadd.s32 1, %s21
      %s31 = scalar_select %p28, %s30, %s21
      %p32 = scmp.ge.s32.totalorder %s31, 2
      %s33 = scalar_select %p32, 0, %s31
      %s35 = sadd.s32 %s34, 1
      %p38 = scmp.eq.s32.totalorder %s14, 1
      %p39 = scmp.ne.s32.totalorder %s34, %s36
      %p40 = scmp.eq.s32.totalorder %s14, 0
      %p41 = por %p39, %p40
      %p42 = scmp.ne.s32.totalorder %s34, %s36
      %p43 = scmp.eq.s32.totalorder %s19, 1
      %p44 = por %p42, %p43
      %p45 = scmp.ne.s32.totalorder %s36, %s37
      %p46 = scmp.eq.s32.totalorder %s19, 0
      %p47 = por %p45, %p46
      %p48 = scmp.ne.s32.totalorder %s36, %s37
      %p49 = scmp.eq.s32.totalorder %s20, 1
      %p50 = por %p48, %p49
      %p52 = scmp.ne.s32.totalorder %s37, %s51
      %p53 = scmp.eq.s32.totalorder %s20, 0
      %p54 = por %p52, %p53
      %s56 = sadd.s32 %s55, 1
      %p59 = scmp.eq.s32.totalorder %s14, 1
      %p60 = scmp.ne.s32.totalorder %s55, %s57
      %p61 = scmp.eq.s32.totalorder %s14, 0
      %p62 = por %p60, %p61
      %p63 = scmp.ne.s32.totalorder %s55, %s57
      %p64 = scmp.eq.s32.totalorder %s19, 1
      %p65 = por %p63, %p64
      %p66 = scmp.ne.s32.totalorder %s57, %s58
      %p67 = scmp.eq.s32.totalorder %s19, 0
      %p68 = por %p66, %p67
      %p69 = scmp.ne.s32.totalorder %s57, %s58
      %p70 = scmp.eq.s32.totalorder %s20, 1
      %p71 = por %p69, %p70
      %p73 = scmp.ne.s32.totalorder %s58, %s72
      %p74 = scmp.eq.s32.totalorder %s20, 0
      %p75 = por %p73, %p74
      %s76 = ssub.s32 %s21, %s33
      %s77 = ssub.s32 %s22, %s29
      %s78 = sor.u32 %s76, %s77
      %p79 = scmp.eq.s32.totalorder %s78, 0
      %s81 = sadd.s32 %s80, 1
      %s82 = scalar_select %p79, %s80, %s81
      %p85 = pneg %p79
      %p86 = scmp.eq.s32.totalorder %s14, 1
      %p87 = por %p85, %p86
      %p88 = scmp.ne.s32.totalorder %s80, %s83
      %p89 = scmp.eq.s32.totalorder %s14, 0
      %p90 = por %p88, %p89
      %p91 = scmp.ne.s32.totalorder %s80, %s83
      %p92 = scmp.eq.s32.totalorder %s19, 1
      %p93 = por %p91, %p92
      %p94 = scmp.ne.s32.totalorder %s83, %s84
      %p95 = scmp.eq.s32.totalorder %s19, 0
      %p96 = por %p94, %p95
      %p97 = scmp.ne.s32.totalorder %s83, %s84
      %p98 = scmp.eq.s32.totalorder %s20, 1
      %p99 = por %p97, %p98
      %p101 = scmp.ne.s32.totalorder %s84, %s100
      %p102 = scmp.eq.s32.totalorder %s20, 0
      %p103 = por %p101, %p102
      %s104 = ssub.s32 %s21, %s33
      %s105 = ssub.s32 %s22, %s29
      %s106 = sor.u32 %s104, %s105
      %p107 = scmp.eq.s32.totalorder %s106, 0
      %s109 = sadd.s32 %s108, 1
      %s110 = scalar_select %p107, %s108, %s109
      %p113 = pneg %p107
      %p114 = scmp.eq.s32.totalorder %s14, 1
      %p115 = por %p113, %p114
      %p116 = scmp.ne.s32.totalorder %s108, %s111
      %p117 = scmp.eq.s32.totalorder %s14, 0
      %p118 = por %p116, %p117
      %p119 = scmp.ne.s32.totalorder %s108, %s111
      %p120 = scmp.eq.s32.totalorder %s19, 1
      %p121 = por %p119, %p120
      %p122 = scmp.ne.s32.totalorder %s111, %s112
      %p123 = scmp.eq.s32.totalorder %s19, 0
      %p124 = por %p122, %p123
      %p125 = scmp.ne.s32.totalorder %s111, %s112
      %p126 = scmp.eq.s32.totalorder %s20, 1
      %p127 = por %p125, %p126
      %p129 = scmp.ne.s32.totalorder %s112, %s128
      %p130 = scmp.eq.s32.totalorder %s20, 0
      %p131 = por %p129, %p130
      %p132 = scmp.le.s32.totalorder 1, %s14
      %p133 = scmp.lt.s32.totalorder %s14, 3
      %p134 = pnand %p132, %p133
      %p135 = pneg %p134
      // Predicated region
      $region9: #{tpu_custom_call.1} parent=5 // pred_check
        _
      $region10: #{tpu_custom_call.1} parent=5 // pred_check_branch
        %137 = sbr.rel (%p134) target = $region12
      $region11: #{tpu_custom_call.1} parent=5 // pred_region
        %s138 = ssub.s32 %s14, 1
        // Predicated region
        $region13: #{tpu_custom_call.1} parent=11 // pred_check
          %p139 = pneg %p47
        $region14: #{tpu_custom_call.1} parent=11 // pred_check_branch
          %141 = sbr.rel (%p139) target = $region16
        $region15: #{tpu_custom_call.1} parent=11 // pred_region
          %s143 = ssub.s32 128, 128
          %144 = vsyncadd [#allocation4], %s143
          %s146 = sshll.u32 %s0, 4
          %s147 = int_to_ptr.vmem [resolvable:$true] %s146
          %149 = dma.vmem_to_smem %s147, 128, [#allocation2], [#allocation4]
        $region16: #{tpu_custom_call.1} parent=11 // pred_fallthru
          _
        // Predicated region
        $region17: #{tpu_custom_call.1} parent=11 // pred_check
          %p150 = pneg %p68
        $region18: #{tpu_custom_call.1} parent=11 // pred_check_branch
          %152 = sbr.rel (%p150) target = $region20
        $region19: #{tpu_custom_call.1} parent=11 // pred_region
          %s154 = ssub.s32 16, 16
          %155 = vsyncadd [#allocation6], %s154
          %s157 = sshll.u32 %s1, 4
          %s158 = int_to_ptr.vmem [resolvable:$true] %s157
          %160 = dma.vmem_to_smem %s158, 16, [#allocation5], [#allocation6]
        $region20: #{tpu_custom_call.1} parent=11 // pred_fallthru
          _
      $region12: #{tpu_custom_call.1} parent=5 // pred_fallthru
        _
      %p161 = scmp.lt.s32.totalorder %s14, 2
      // Predicated region
      $region21: #{tpu_custom_call.1} parent=5 // pred_check
        %p162 = pneg %p161
      $region22: #{tpu_custom_call.1} parent=5 // pred_check_branch
        %164 = sbr.rel (%p162) target = $region24
      $region23: #{tpu_custom_call.1} parent=5 // pred_region
        // Predicated region
        $region25: #{tpu_custom_call.1} parent=23 // pred_check
          %p165 = pneg %p90
        $region26: #{tpu_custom_call.1} parent=23 // pred_check_branch
          %167 = sbr.rel (%p165) target = $region28
        $region27: #{tpu_custom_call.1} parent=23 // pred_region
          %s168 = smul.u32 2, %s22
          %p169 = scmp.lt.s32.totalorder %s21, 1
          %s170 = scalar_select %p169, %s21, 1
          %p171 = scmp.lt.s32.totalorder %s168, 1
          %s172 = scalar_select %p171, %s168, 1
          %s173 = smul.addr %s170, 2
          %s174 = sadd.s32 %s172, %s173
          %s175 = smul.addr %s174, 4
          %s176 = scalar_lea.vmem %s2, %s175
          %s177 = smul.u32 2, %s22
        $region28: #{tpu_custom_call.1} parent=23 // pred_fallthru
          _
      $region24: #{tpu_custom_call.1} parent=5 // pred_fallthru
        _
      %p178 = scmp.le.s32.totalorder 1, %s14
      %p179 = scmp.lt.s32.totalorder %s14, 3
      %p180 = pnand %p178, %p179
      %p181 = pneg %p180
      // Predicated region
      $region29: #{tpu_custom_call.1} parent=5 // pred_check
        _
      $region30: #{tpu_custom_call.1} parent=5 // pred_check_branch
        %183 = sbr.rel (%p180) target = $region32
      $region31: #{tpu_custom_call.1} parent=5 // pred_region
        %s184 = ssub.s32 %s14, 1
        // Predicated region
        $region33: #{tpu_custom_call.1} parent=31 // pred_check
          %p185 = pneg %p47
        $region34: #{tpu_custom_call.1} parent=31 // pred_check_branch
          %187 = sbr.rel (%p185) target = $region36
        $region35: #{tpu_custom_call.1} parent=31 // pred_region
          %188 = dma.done [#allocation4], 128
        $region36: #{tpu_custom_call.1} parent=31 // pred_fallthru
          _
        // Predicated region
        $region37: #{tpu_custom_call.1} parent=31 // pred_check
          %p189 = pneg %p68
        $region38: #{tpu_custom_call.1} parent=31 // pred_check_branch
          %191 = sbr.rel (%p189) target = $region40
        $region39: #{tpu_custom_call.1} parent=31 // pred_region
          %192 = dma.done [#allocation6], 16
        $region40: #{tpu_custom_call.1} parent=31 // pred_fallthru
          _
        %193 = sfence
        %p194 = pneg %p47
        %p195 = pneg %p44
        %p196 = pneg %p68
        %p197 = pneg %p65
        %s198 = smul.u32 2, %s24
        %p199 = scmp.lt.s32.totalorder %s23, 1
        %s200 = scalar_select %p199, %s23, 1
        %p201 = scmp.lt.s32.totalorder %s198, 1
        %s202 = scalar_select %p201, %s198, 1
        %s203 = smul.addr %s200, 2
        %s204 = sadd.s32 %s202, %s203
        %s205 = smul.addr %s204, 4
        %s206 = scalar_lea.vmem %s2, %s205
        %p207 = pneg %p96
        %p208 = pneg %p93
        %p209 = pneg %p124
        %p210 = pneg %p121
        %s211 = sand.u32 %s111, 1
        %s212 = scalar_lea.sflag [#allocation3], %s211
        %s213 = sand.u32 %s111, 1
        %s214 = smul.addr %s213, 16
        %s215 = scalar_lea.vmem [#allocation7], %s214
        %s216 = smul.u32 2, %s24
        %p217 = scmp.lt.s32.totalorder %s23, 1
        %s218 = scalar_select %p217, %s23, 1
        %p219 = scmp.lt.s32.totalorder %s216, 1
        %s220 = scalar_select %p219, %s216, 1
        %s221 = smul.addr %s218, 2
        %s222 = sadd.s32 %s220, %s221
        %s223 = smul.addr %s222, 4
        %s224 = scalar_lea.vmem %s2, %s223
        %s225 = smul.u32 2, %s24
        %s226 = smul.u32 2, %s24
        %v227 = vld [vmem:[%s224] ss:$4 sm:$0x3]
        %s228 = scalar_lea.vmem %s224, 1
        %v229 = vld [vmem:[%s228] ss:$4 sm:$0x3]
        %s230 = scalar_lea.vmem %s224, 2
        %v231 = vld [vmem:[%s230] ss:$4 sm:$0x3]
        %s232 = sld [smem:[#allocation2]]
        %v233 = vstv %s232
        %v234 = vmul.f32 %v233, %v227
        %s235 = sld [smem:[#allocation2 + $0x1]]
        %v236 = vstv %s235
        %v237 = vmul.f32 %v236, %v229
        %v238 = vadd.f32 %v234, %v237
        %s239 = sld [smem:[#allocation2 + $0x2]]
        %v240 = vstv %s239
        %v241 = vmul.f32 %v240, %v231
        %v242 = vadd.f32 %v238, %v241
        %s243 = sld [smem:[#allocation5]]
        %v244 = vstv %s243
        %v245 = vadd.f32 %v242, %v244
        %v246 = vlaneseq
        %vm247 = vcmp.ge.s32.totalorder %v246, 0
        %vm248 = vcmp.lt.s32.totalorder %v246, 256
        %vm249 = vmand %vm247, %vm248
        %250 = vst.msk [vmem:[%s215] ss:$8 sm:$0x3] %vm249, %v245
        %251 = vst.msk [vmem:[%s215] ss:$8 sm:$0x0] %vm249, %v245
        %s252 = sld [smem:[#allocation2 + $0x80]]
        %v253 = vstv %s252
        %v254 = vmul.f32 %v253, %v227
        %s255 = sld [smem:[#allocation2 + $0x81]]
        %v256 = vstv %s255
        %v257 = vmul.f32 %v256, %v229
        %v258 = vadd.f32 %v254, %v257
        %s259 = sld [smem:[#allocation2 + $0x82]]
        %v260 = vstv %s259
        %v261 = vmul.f32 %v260, %v231
        %v262 = vadd.f32 %v258, %v261
        %s263 = sld [smem:[#allocation5 + $0x1]]
        %v264 = vstv %s263
        %v265 = vadd.f32 %v262, %v264
        %s266 = scalar_lea.vmem %s215, 1 [#allocation7]
        %267 = vst.msk [vmem:[%s266] ss:$8 sm:$0x3] %vm249, %v265
        %268 = vst.msk [vmem:[%s266] ss:$8 sm:$0x0] %vm249, %v265
        %s269 = sld [smem:[#allocation2 + $0x100]]
        %v270 = vstv %s269
        %v271 = vmul.f32 %v270, %v227
        %s272 = sld [smem:[#allocation2 + $0x101]]
        %v273 = vstv %s272
        %v274 = vmul.f32 %v273, %v229
        %v275 = vadd.f32 %v271, %v274
        %s276 = sld [smem:[#allocation2 + $0x102]]
        %v277 = vstv %s276
        %v278 = vmul.f32 %v277, %v231
        %v279 = vadd.f32 %v275, %v278
        %s280 = sld [smem:[#allocation5 + $0x2]]
        %v281 = vstv %s280
        %v282 = vadd.f32 %v279, %v281
        %s283 = scalar_lea.vmem %s215, 2 [#allocation7]
        %284 = vst.msk [vmem:[%s283] ss:$8 sm:$0x3] %vm249, %v282
        %285 = vst.msk [vmem:[%s283] ss:$8 sm:$0x0] %vm249, %v282
        %s286 = sld [smem:[#allocation2 + $0x180]]
        %v287 = vstv %s286
        %v288 = vmul.f32 %v287, %v227
        %s289 = sld [smem:[#allocation2 + $0x181]]
        %v290 = vstv %s289
        %v291 = vmul.f32 %v290, %v229
        %v292 = vadd.f32 %v288, %v291
        %s293 = sld [smem:[#allocation2 + $0x182]]
        %v294 = vstv %s293
        %v295 = vmul.f32 %v294, %v231
        %v296 = vadd.f32 %v292, %v295
        %s297 = sld [smem:[#allocation5 + $0x3]]
        %v298 = vstv %s297
        %v299 = vadd.f32 %v296, %v298
        %s300 = scalar_lea.vmem %s215, 3 [#allocation7]
        %301 = vst.msk [vmem:[%s300] ss:$8 sm:$0x3] %vm249, %v299
        %302 = vst.msk [vmem:[%s300] ss:$8 sm:$0x0] %vm249, %v299
        %s303 = sld [smem:[#allocation2 + $0x200]]
        %v304 = vstv %s303
        %v305 = vmul.f32 %v304, %v227
        %s306 = sld [smem:[#allocation2 + $0x201]]
        %v307 = vstv %s306
        %v308 = vmul.f32 %v307, %v229
        %v309 = vadd.f32 %v305, %v308
        %s310 = sld [smem:[#allocation2 + $0x202]]
        %v311 = vstv %s310
        %v312 = vmul.f32 %v311, %v231
        %v313 = vadd.f32 %v309, %v312
        %s314 = sld [smem:[#allocation5 + $0x4]]
        %v315 = vstv %s314
        %v316 = vadd.f32 %v313, %v315
        %s317 = scalar_lea.vmem %s215, 4 [#allocation7]
        %318 = vst.msk [vmem:[%s317] ss:$8 sm:$0x3] %vm249, %v316
        %319 = vst.msk [vmem:[%s317] ss:$8 sm:$0x0] %vm249, %v316
        %s320 = sld [smem:[#allocation2 + $0x280]]
        %v321 = vstv %s320
        %v322 = vmul.f32 %v321, %v227
        %s323 = sld [smem:[#allocation2 + $0x281]]
        %v324 = vstv %s323
        %v325 = vmul.f32 %v324, %v229
        %v326 = vadd.f32 %v322, %v325
        %s327 = sld [smem:[#allocation2 + $0x282]]
        %v328 = vstv %s327
        %v329 = vmul.f32 %v328, %v231
        %v330 = vadd.f32 %v326, %v329
        %s331 = sld [smem:[#allocation5 + $0x5]]
        %v332 = vstv %s331
        %v333 = vadd.f32 %v330, %v332
        %s334 = scalar_lea.vmem %s215, 5 [#allocation7]
        %335 = vst.msk [vmem:[%s334] ss:$8 sm:$0x3] %vm249, %v333
        %336 = vst.msk [vmem:[%s334] ss:$8 sm:$0x0] %vm249, %v333
        %s337 = sld [smem:[#allocation2 + $0x300]]
        %v338 = vstv %s337
        %v339 = vmul.f32 %v338, %v227
        %s340 = sld [smem:[#allocation2 + $0x301]]
        %v341 = vstv %s340
        %v342 = vmul.f32 %v341, %v229
        %v343 = vadd.f32 %v339, %v342
        %s344 = sld [smem:[#allocation2 + $0x302]]
        %v345 = vstv %s344
        %v346 = vmul.f32 %v345, %v231
        %v347 = vadd.f32 %v343, %v346
        %s348 = sld [smem:[#allocation5 + $0x6]]
        %v349 = vstv %s348
        %v350 = vadd.f32 %v347, %v349
        %s351 = scalar_lea.vmem %s215, 6 [#allocation7]
        %352 = vst.msk [vmem:[%s351] ss:$8 sm:$0x3] %vm249, %v350
        %353 = vst.msk [vmem:[%s351] ss:$8 sm:$0x0] %vm249, %v350
        %s354 = sld [smem:[#allocation2 + $0x380]]
        %v355 = vstv %s354
        %v356 = vmul.f32 %v355, %v227
        %s357 = sld [smem:[#allocation2 + $0x381]]
        %v358 = vstv %s357
        %v359 = vmul.f32 %v358, %v229
        %v360 = vadd.f32 %v356, %v359
        %s361 = sld [smem:[#allocation2 + $0x382]]
        %v362 = vstv %s361
        %v363 = vmul.f32 %v362, %v231
        %v364 = vadd.f32 %v360, %v363
        %s365 = sld [smem:[#allocation5 + $0x7]]
        %v366 = vstv %s365
        %v367 = vadd.f32 %v364, %v366
        %s368 = scalar_lea.vmem %s215, 7 [#allocation7]
        %369 = vst.msk [vmem:[%s368] ss:$8 sm:$0x3] %vm249, %v367
        %370 = vst.msk [vmem:[%s368] ss:$8 sm:$0x0] %vm249, %v367
        %s371 = sand.u32 %s111, 1
        %s372 = scalar_lea.sflag [#allocation3], %s371
        %s373 = sand.u32 %s111, 1
        %s374 = smul.addr %s373, 16
        %s375 = scalar_lea.vmem [#allocation7], %s374
        // Predicated region
        $region41: #{tpu_custom_call.1} parent=31 // pred_check
          %p376 = pneg %p121
        $region42: #{tpu_custom_call.1} parent=31 // pred_check_branch
          %378 = sbr.rel (%p376) target = $region44
        $region43: #{tpu_custom_call.1} parent=31 // pred_region
          %s379 = smul.u32 2, %s24
          %s381 = ssub.s32 256, 256
          %382 = vsyncadd %s372, %s381
          %s383 = smul.addr %s23, 2
          %s384 = sadd.s32 %s379, %s383
          %s385 = smul.addr %s384, 128
          %s386 = scalar_lea.hbm %s3, %s385
          %s388 = sshll.u32 %s375, 4
          %s389 = int_to_ptr.vmem [resolvable:$true] %s388
          %391 = dma.vmem_to_hbm [thread:$0]  %s389, 256, %s386, %s372
        $region44: #{tpu_custom_call.1} parent=31 // pred_fallthru
          _
      $region32: #{tpu_custom_call.1} parent=5 // pred_fallthru
        _
      %p392 = scmp.le.s32.totalorder 2, %s14
      // Predicated region
      $region45: #{tpu_custom_call.1} parent=5 // pred_check
        %p393 = pneg %p392
      $region46: #{tpu_custom_call.1} parent=5 // pred_check_branch
        %395 = sbr.rel (%p393) target = $region48
      $region47: #{tpu_custom_call.1} parent=5 // pred_region
        %s396 = ssub.s32 %s14, 2
        // Predicated region
        $region49: #{tpu_custom_call.1} parent=47 // pred_check
          %p397 = pneg %p127
        $region50: #{tpu_custom_call.1} parent=47 // pred_check_branch
          %399 = sbr.rel (%p397) target = $region52
        $region51: #{tpu_custom_call.1} parent=47 // pred_region
          %s400 = sand.u32 %s112, 1
          %s401 = scalar_lea.sflag [#allocation3], %s400
          %s402 = sand.u32 %s112, 1
          %s403 = smul.addr %s402, 16
          %s404 = scalar_lea.vmem [#allocation7], %s403
          %405 = dma.done %s401, 256
        $region52: #{tpu_custom_call.1} parent=47 // pred_fallthru
          _
      $region48: #{tpu_custom_call.1} parent=5 // pred_fallthru
        _
    $region6: #{tpu_custom_call.1} parent=1 // loop_footer
      %s18 = sadd.s32 1, %s14
    $region7: #{tpu_custom_call.1} parent=1 // loop_footer_branch
      %13 = sbr.rel target = $region3
    $region8: #{tpu_custom_call.1} parent=1 // loop_exit
      _
    %406 = vsyncpa [#allocation3], 1
    %s407 = scalar_lea.sflag [#allocation3], 1
    %408 = vsyncpa %s407, 1
    %409 = vsyncpa [#allocation4], 1
    %s410 = scalar_lea.sflag [#allocation4], 1
    %411 = vsyncpa %s410, 1
    %412 = vsyncpa [#allocation6], 1

</llo_original>
